<compile_context>
chip_gen: v5e
topology: v5e:2x2
jax: 0.10.0
libtpu: 0.0.40
codegen_flags: <defaults>
</compile_context>

<pallas_src>
import math

import jax
import jax.numpy as jnp
from jax.experimental import pallas as pl
from jax.experimental.pallas import tpu as pltpu


def sft_kernel(feat_ref, cond_ref, w0_ref, b0_ref, w1_ref, b1_ref, out_ref):
    # feat_ref: (out_nc, THW)     cond_ref: (in_nc, THW)
    # w0_ref:   (2*nf, in_nc)     b0_ref:   (2*nf, 1)       -> [ws0 ; wh0]
    # w1_ref:   (2*out_nc, 2*nf)  b1_ref:   (2*out_nc, 1)   -> blockdiag(ws1, wh1), [bs1+1 ; bh1]
    out_nc = out_ref.shape[0]

    cond = cond_ref[...]
    # conv0 for both branches fused along the output-channel (sublane) axis.
    h = jnp.dot(w0_ref[...], cond, preferred_element_type=jnp.float32) + b0_ref[...]
    h = jnp.maximum(h, 0.2 * h)                       # leaky_relu(slope=0.2)
    # conv1 for both branches as a single block-diagonal matmul.
    y = jnp.dot(w1_ref[...], h, preferred_element_type=jnp.float32) + b1_ref[...]
    scale1 = y[:out_nc, :]                            # scale + 1 (the +1 lives in b1)
    shift = y[out_nc:, :]
    out_ref[...] = (feat_ref[...] * scale1 + shift).astype(out_ref.dtype)


def _pack_params(p, out_nc, nf):
    """Pack per-conv weights into the fused kernel operands."""
    w0 = jnp.concatenate([p["ws0"], p["wh0"]], axis=0)                  # (2nf, in_nc)
    b0 = jnp.concatenate([p["bs0"], p["bh0"]], axis=0)[:, None]         # (2nf, 1)
    w1 = jnp.zeros((2 * out_nc, 2 * nf), jnp.float32)
    w1 = w1.at[:out_nc, :nf].set(p["ws1"]).at[out_nc:, nf:].set(p["wh1"])
    # Fold the `+1` of `feat * (scale + 1)` into the scale-branch bias.
    b1 = jnp.concatenate([p["bs1"] + 1.0, p["bh1"]], axis=0)[:, None]   # (2out_nc, 1)
    return w0, b0, w1, b1


def sft_layer(feat_nchw, cond_nchw, params, *, thw_target=4096):
    """feat_nchw: (N, out_nc, H, W) = x[0]; cond_nchw: (N, in_nc, H, W) = x[1]."""
    N, out_nc, H, W = feat_nchw.shape
    _, in_nc, _, _ = cond_nchw.shape
    nf = params["ws1"].shape[1]
    HW = H * W

    # NCHW -> (N, C, H*W): pure reshape, no transpose / extra HBM traffic.
    feat = feat_nchw.reshape(N, out_nc, HW)
    cond = cond_nchw.reshape(N, in_nc, HW)

    # Pixel-tile width: full H*W if it fits in one tile (full-dim blocks are
    # always legal); otherwise a multiple of 128.  A ragged last tile is fine:
    # Pallas masks the boundary (no padded copies of feat/cond needed).
    if HW <= thw_target:
        thw = HW
    else:
        thw = max(128, (thw_target // 128) * 128)

    w0, b0, w1, b1 = _pack_params(params, out_nc, nf)

    grid = (N, pl.cdiv(HW, thw))
    pix_spec = lambda c: pl.BlockSpec((None, c, thw), lambda n, p: (n, 0, p))
    const_spec = lambda r, c: pl.BlockSpec((r, c), lambda n, p: (0, 0))

    out = pl.pallas_call(
        sft_kernel,
        out_shape=jax.ShapeDtypeStruct((N, out_nc, HW), jnp.float32),
        grid_spec=pltpu.PrefetchScalarGridSpec(
            num_scalar_prefetch=0,
            grid=grid,
            in_specs=[
                pix_spec(out_nc),               # feat  (N, out_nc, HW)
                pix_spec(in_nc),                # cond  (N, in_nc, HW)
                const_spec(2 * nf, in_nc),      # w0  = [ws0 ; wh0]
                const_spec(2 * nf, 1),          # b0
                const_spec(2 * out_nc, 2 * nf), # w1  = blockdiag(ws1, wh1)
                const_spec(2 * out_nc, 1),      # b1  = [bs1 + 1 ; bh1]
            ],
            out_specs=pix_spec(out_nc),
        ),
        compiler_params=pltpu.CompilerParams(
            dimension_semantics=("parallel", "parallel")),
    )(feat, cond, w0, b0, w1, b1)

    return out.reshape(N, out_nc, H, W)


def init_params(key, in_nc=32, out_nc=64, nf=32):
    """Deterministic synthetic weights, PyTorch Conv2d layout: w=(cout, cin), b=(cout,)."""
    ks = jax.random.split(key, 8)

    def w(k, cout, cin):
        bound = 1.0 / math.sqrt(cin)
        return jax.random.uniform(k, (cout, cin), jnp.float32, -bound, bound)

    def b(k, cout, cin):
        bound = 1.0 / math.sqrt(cin)
        return jax.random.uniform(k, (cout,), jnp.float32, -bound, bound)

    return dict(
        ws0=w(ks[0], nf, in_nc), bs0=b(ks[1], nf, in_nc),
        ws1=w(ks[2], out_nc, nf), bs1=b(ks[3], out_nc, nf),
        wh0=w(ks[4], nf, in_nc), bh0=b(ks[5], nf, in_nc),
        wh1=w(ks[6], out_nc, nf), bh1=b(ks[7], out_nc, nf),
    )


def sft_layer_ref(feat, cond, p):
    """Pure-JAX NCHW reference (1x1 convs as einsum)."""
    def conv1x1(x, w, b):  # w: (cout, cin), b: (cout,)
        return jnp.einsum("nchw,oc->nohw", x, w) + b.reshape(1, -1, 1, 1)

    hs = conv1x1(cond, p["ws0"], p["bs0"])
    hs = jnp.where(hs > 0, hs, 0.2 * hs)
    scale = conv1x1(hs, p["ws1"], p["bs1"])
    hh = conv1x1(cond, p["wh0"], p["bh0"])
    hh = jnp.where(hh > 0, hh, 0.2 * hh)
    shift = conv1x1(hh, p["wh1"], p["bh1"])
    return feat * (scale + 1.0) + shift


if __name__ == "__main__":
    key = jax.random.PRNGKey(0)
    k_feat, k_cond, k_par = jax.random.split(key, 3)

    N, in_nc, out_nc, nf, H, Wsp = 2, 32, 64, 32, 16, 16
    params = init_params(k_par, in_nc, out_nc, nf)

    # x[0] = feat, x[1] = cond
    feat = jax.random.normal(k_feat, (N, out_nc, H, Wsp), jnp.float32)
    cond = jax.random.normal(k_cond, (N, in_nc, H, Wsp), jnp.float32)

    out = sft_layer(feat, cond, params)
    out = jax.block_until_ready(out)

    ref = sft_layer_ref(feat, cond, params)
    assert out.shape == (N, out_nc, H, Wsp)
    assert jnp.allclose(out, ref, atol=1e-4, rtol=1e-4), "mismatch vs reference"

    # Also exercise the multi-tile path with a ragged last tile
    # (H*W = 2304 with a 1024-lane tile -> grid (2, 3), last tile 256 wide).
    H2 = W2 = 48
    feat2 = jax.random.normal(k_feat, (N, out_nc, H2, W2), jnp.float32)
    cond2 = jax.random.normal(k_cond, (N, in_nc, H2, W2), jnp.float32)
    out2 = jax.block_until_ready(sft_layer(feat2, cond2, params, thw_target=1024))
    ref2 = sft_layer_ref(feat2, cond2, params)
    assert out2.shape == (N, out_nc, H2, W2)
    assert jnp.allclose(out2, ref2, atol=1e-4, rtol=1e-4), "mismatch (ragged tiles)"

    print("KERNEL_OK")
</pallas_src>

<mosaic_0001>
module attributes {stable_mosaic.version = 11 : i64} {
  func.func @sft_kernel(%arg0: i32, %arg1: i32, %arg2: memref<1x64x256xf32, #tpu.memory_space<vmem>>, %arg3: memref<1x32x256xf32, #tpu.memory_space<vmem>>, %arg4: memref<64x32xf32, #tpu.memory_space<vmem>>, %arg5: memref<64x1xf32, #tpu.memory_space<vmem>>, %arg6: memref<128x64xf32, #tpu.memory_space<vmem>>, %arg7: memref<128x1xf32, #tpu.memory_space<vmem>>, %arg8: memref<1x64x256xf32, #tpu.memory_space<vmem>>) attributes {dimension_semantics = [#tpu.dimension_semantics<parallel>, #tpu.dimension_semantics<parallel>], iteration_bounds = array<i64: 2, 1>, scalar_prefetch = 0 : i64, scratch_operands = 0 : i64, tpu.core_type = #tpu.core_type<tc>, window_params = [{transform_indices = @transform_0, window_bounds = array<i64: 1, 64, 256>}, {transform_indices = @transform_1, window_bounds = array<i64: 1, 32, 256>}, {pipeline_mode = #tpu.pipeline_mode<synchronous>, transform_indices = @transform_2, window_bounds = array<i64: 64, 32>}, {pipeline_mode = #tpu.pipeline_mode<synchronous>, transform_indices = @transform_3, window_bounds = array<i64: 64, 1>}, {pipeline_mode = #tpu.pipeline_mode<synchronous>, transform_indices = @transform_4, window_bounds = array<i64: 128, 64>}, {pipeline_mode = #tpu.pipeline_mode<synchronous>, transform_indices = @transform_5, window_bounds = array<i64: 128, 1>}, {transform_indices = @transform_6, window_bounds = array<i64: 1, 64, 256>}]} {
    %c0 = arith.constant 0 : index
    %c0_0 = arith.constant 0 : index
    %c0_1 = arith.constant 0 : index
    %0 = vector.load %arg3[%c0, %c0_0, %c0_1] : memref<1x32x256xf32, #tpu.memory_space<vmem>>, vector<1x32x256xf32>
    %1 = vector.shape_cast %0 : vector<1x32x256xf32> to vector<32x256xf32>
    %c0_2 = arith.constant 0 : index
    %c0_3 = arith.constant 0 : index
    %2 = vector.load %arg4[%c0_2, %c0_3] : memref<64x32xf32, #tpu.memory_space<vmem>>, vector<64x32xf32>
    %cst = arith.constant dense<0.000000e+00> : vector<64x256xf32>
    %3 = tpu.matmul %2, %1, %cst {dimension_numbers = #tpu.dot_dimension_numbers<[1], [0], [0], [1], [0, 0, 1, 1], [], []>} : vector<64x32xf32>, vector<32x256xf32>, vector<64x256xf32> -> vector<64x256xf32>
    %c0_4 = arith.constant 0 : index
    %c0_5 = arith.constant 0 : index
    %4 = vector.load %arg5[%c0_4, %c0_5] : memref<64x1xf32, #tpu.memory_space<vmem>>, vector<64x1xf32>
    %5 = vector.broadcast %4 : vector<64x1xf32> to vector<64x256xf32>
    %6 = arith.addf %3, %5 : vector<64x256xf32>
    %cst_6 = arith.constant 2.000000e-01 : f32
    %7 = vector.broadcast %cst_6 : f32 to vector<64x256xf32>
    %8 = arith.mulf %7, %6 : vector<64x256xf32>
    %9 = arith.maximumf %6, %8 : vector<64x256xf32>
    %c0_7 = arith.constant 0 : index
    %c0_8 = arith.constant 0 : index
    %10 = vector.load %arg6[%c0_7, %c0_8] : memref<128x64xf32, #tpu.memory_space<vmem>>, vector<128x64xf32>
    %cst_9 = arith.constant dense<0.000000e+00> : vector<128x256xf32>
    %11 = tpu.matmul %10, %9, %cst_9 {dimension_numbers = #tpu.dot_dimension_numbers<[1], [0], [0], [1], [0, 0, 1, 1], [], []>} : vector<128x64xf32>, vector<64x256xf32>, vector<128x256xf32> -> vector<128x256xf32>
    %c0_10 = arith.constant 0 : index
    %c0_11 = arith.constant 0 : index
    %12 = vector.load %arg7[%c0_10, %c0_11] : memref<128x1xf32, #tpu.memory_space<vmem>>, vector<128x1xf32>
    %13 = vector.broadcast %12 : vector<128x1xf32> to vector<128x256xf32>
    %14 = arith.addf %11, %13 : vector<128x256xf32>
    %15 = vector.extract_strided_slice %14 {offsets = [0, 0], sizes = [64, 256], strides = [1, 1]} : vector<128x256xf32> to vector<64x256xf32>
    %16 = vector.extract_strided_slice %14 {offsets = [64, 0], sizes = [64, 256], strides = [1, 1]} : vector<128x256xf32> to vector<64x256xf32>
    %c0_12 = arith.constant 0 : index
    %c0_13 = arith.constant 0 : index
    %c0_14 = arith.constant 0 : index
    %17 = vector.load %arg2[%c0_12, %c0_13, %c0_14] : memref<1x64x256xf32, #tpu.memory_space<vmem>>, vector<1x64x256xf32>
    %18 = vector.shape_cast %17 : vector<1x64x256xf32> to vector<64x256xf32>
    %19 = arith.mulf %18, %15 : vector<64x256xf32>
    %20 = arith.addf %19, %16 : vector<64x256xf32>
    %c0_15 = arith.constant 0 : index
    %c0_16 = arith.constant 0 : index
    %c0_17 = arith.constant 0 : index
    %21 = vector.load %arg8[%c0_15, %c0_16, %c0_17] : memref<1x64x256xf32, #tpu.memory_space<vmem>>, vector<1x64x256xf32>
    %22 = vector.shape_cast %21 : vector<1x64x256xf32> to vector<64x256xf32>
    %23 = vector.shape_cast %20 : vector<64x256xf32> to vector<1x64x256xf32>
    tpu.vector_store %arg8[%c0_15, %c0_16, %c0_17], %23 {strides = array<i32>} : memref<1x64x256xf32, #tpu.memory_space<vmem>>, vector<1x64x256xf32>,
    return
  }
  func.func @transform_0(%arg0: i32, %arg1: i32) -> (i32, i32, i32) {
    %c0_i32 = arith.constant 0 : i32
    %c0_i32_0 = arith.constant 0 : i32
    return %arg0, %c0_i32, %arg1 : i32, i32, i32
  }
  func.func @transform_1(%arg0: i32, %arg1: i32) -> (i32, i32, i32) {
    %c0_i32 = arith.constant 0 : i32
    %c0_i32_0 = arith.constant 0 : i32
    return %arg0, %c0_i32, %arg1 : i32, i32, i32
  }
  func.func @transform_2(%arg0: i32, %arg1: i32) -> (i32, i32) {
    %c0_i32 = arith.constant 0 : i32
    %c0_i32_0 = arith.constant 0 : i32
    %c0_i32_1 = arith.constant 0 : i32
    return %c0_i32, %c0_i32_0 : i32, i32
  }
  func.func @transform_3(%arg0: i32, %arg1: i32) -> (i32, i32) {
    %c0_i32 = arith.constant 0 : i32
    %c0_i32_0 = arith.constant 0 : i32
    %c0_i32_1 = arith.constant 0 : i32
    return %c0_i32, %c0_i32_0 : i32, i32
  }
  func.func @transform_4(%arg0: i32, %arg1: i32) -> (i32, i32) {
    %c0_i32 = arith.constant 0 : i32
    %c0_i32_0 = arith.constant 0 : i32
    %c0_i32_1 = arith.constant 0 : i32
    return %c0_i32, %c0_i32_0 : i32, i32
  }
  func.func @transform_5(%arg0: i32, %arg1: i32) -> (i32, i32) {
    %c0_i32 = arith.constant 0 : i32
    %c0_i32_0 = arith.constant 0 : i32
    %c0_i32_1 = arith.constant 0 : i32
    return %c0_i32, %c0_i32_0 : i32, i32
  }
  func.func @transform_6(%arg0: i32, %arg1: i32) -> (i32, i32, i32) {
    %c0_i32 = arith.constant 0 : i32
    %c0_i32_0 = arith.constant 0 : i32
    return %arg0, %c0_i32, %arg1 : i32, i32, i32
  }
}

</mosaic_0001>

<llo_original>
// kernel: tpu_custom_call.1
$region0: #{tpu_custom_call.1}
  #allocation0 [shape = 'u32[]', space=smem, size = 0x4, offset = 0x4, fixed_abs, tag = 'smem constant byte address 0x4 - core index']
  #allocation1 [shape = 'u32[72,128]{1,0:T(1,128)}', space=vmem, size = 0x9000, scoped, tag = 'internal scratch']
  %s0 = inlined_call_operand.vmem [shape: f32[2,64,256], index: 0, kind: input, shape index: {}]
  %s1 = inlined_call_operand.vmem [shape: f32[2,32,256], index: 1, kind: input, shape index: {}]
  %s2 = inlined_call_operand.vmem [shape: f32[64,32], index: 2, kind: input, shape index: {}]
  %s3 = inlined_call_operand.vmem [shape: f32[64,1], index: 3, kind: input, shape index: {}]
  %s4 = inlined_call_operand.vmem [shape: f32[128,64], index: 4, kind: input, shape index: {}]
  %s5 = inlined_call_operand.vmem [shape: f32[128,1], index: 5, kind: input, shape index: {}]
  %s6 = inlined_call_operand.hbm [shape: f32[2,64,256], index: 6, kind: output, shape index: {}]
  %s7 = sld [smem:[#allocation0]]
  $region57: #{tpu_custom_call.1} parent=0
    _
  %s9 = ssub.s32 1, %s7
  %s10 = scalar_select 0, %s9, %s7
  $region1: #{tpu_custom_call.1} parent=0
    #allocation2 [shape = 'u8[131072]{0}', space=vmem, size = 0x20000, scoped, tag = 'output window, operand 0']
    #allocation3 [shape = 's32[2]{0}', space=sflag, size = 0x8, scoped, tag = 'scoped memory for tpu_custom_call.1']
    %11 = vsyncpa [#allocation3], 0
    %s12 = scalar_lea.sflag [#allocation3], 1
    %13 = vsyncpa %s12, 0
    loop: start=0, step=1, limit=4
    $region2: #{tpu_custom_call.1} parent=1 // loop_pre_header
      _
    $region3: #{tpu_custom_call.1} parent=1 // loop_header
      %s15 = sphi 0, %s19
      %p16 = scmp.ge.s32.totalorder %s15, 4
      %s22 = sphi 0, %s34
      %s23 = sphi 0, %s30
      %s24 = sphi 0, %s22
      %s25 = sphi 0, %s23
      %s26 = sphi 0, %s24
      %s27 = sphi 0, %s25
      %s39 = sphi 0, %s41
      %s42 = sphi 0, %s39
      %s43 = sphi 0, %s42
      %s59 = sphi 0, %s43
      %s67 = sphi 0, %s69
      %s70 = sphi 0, %s67
      %s71 = sphi 0, %s70
      %s87 = sphi 0, %s71
      %s91 = sphi 0, %s91
      %s93 = sphi 0, %s91
      %s94 = sphi 0, %s93
      %s108 = sphi 0, %s94
      %s112 = sphi 0, %s112
      %s114 = sphi 0, %s112
      %s115 = sphi 0, %s114
      %s129 = sphi 0, %s115
      %s133 = sphi 0, %s133
      %s135 = sphi 0, %s133
      %s136 = sphi 0, %s135
      %s150 = sphi 0, %s136
      %s154 = sphi 0, %s154
      %s156 = sphi 0, %s154
      %s157 = sphi 0, %s156
      %s171 = sphi 0, %s157
      %s179 = sphi 0, %s181
      %s182 = sphi 0, %s179
      %s183 = sphi 0, %s182
      %s199 = sphi 0, %s183
    $region4: #{tpu_custom_call.1} parent=1 // loop_header_branch
      %18 = sbr.rel (%p16) target = $region8
    $region5: #{tpu_custom_call.1} parent=1 // loop_body
      %s20 = ssub.s32 %s15, 1
      %s21 = ssub.s32 %s15, 2
      %s28 = sadd.s32 1, %s23
      %p29 = scmp.ge.s32.totalorder %s28, 1
      %s30 = scalar_select %p29, 0, %s28
      %s31 = sadd.s32 1, %s22
      %s32 = scalar_select %p29, %s31, %s22
      %p33 = scmp.ge.s32.totalorder %s32, 2
      %s34 = scalar_select %p33, 0, %s32
      %s35 = ssub.s32 %s22, %s34
      %s36 = ssub.s32 %s23, %s30
      %s37 = sor.u32 %s35, %s36
      %p38 = scmp.eq.s32.totalorder %s37, 0
      %s40 = sadd.s32 %s39, 1
      %s41 = scalar_select %p38, %s39, %s40
      %p44 = pneg %p38
      %p45 = scmp.eq.s32.totalorder %s15, 1
      %p46 = por %p44, %p45
      %p47 = scmp.ne.s32.totalorder %s39, %s42
      %p48 = scmp.eq.s32.totalorder %s15, 0
      %p49 = por %p47, %p48
      %p50 = scmp.ne.s32.totalorder %s39, %s42
      %p51 = scmp.eq.s32.totalorder %s20, 1
      %p52 = por %p50, %p51
      %p53 = scmp.ne.s32.totalorder %s42, %s43
      %p54 = scmp.eq.s32.totalorder %s20, 0
      %p55 = por %p53, %p54
      %p56 = scmp.ne.s32.totalorder %s42, %s43
      %p57 = scmp.eq.s32.totalorder %s21, 1
      %p58 = por %p56, %p57
      %p60 = scmp.ne.s32.totalorder %s43, %s59
      %p61 = scmp.eq.s32.totalorder %s21, 0
      %p62 = por %p60, %p61
      %s63 = ssub.s32 %s22, %s34
      %s64 = ssub.s32 %s23, %s30
      %s65 = sor.u32 %s63, %s64
      %p66 = scmp.eq.s32.totalorder %s65, 0
      %s68 = sadd.s32 %s67, 1
      %s69 = scalar_select %p66, %s67, %s68
      %p72 = pneg %p66
      %p73 = scmp.eq.s32.totalorder %s15, 1
      %p74 = por %p72, %p73
      %p75 = scmp.ne.s32.totalorder %s67, %s70
      %p76 = scmp.eq.s32.totalorder %s15, 0
      %p77 = por %p75, %p76
      %p78 = scmp.ne.s32.totalorder %s67, %s70
      %p79 = scmp.eq.s32.totalorder %s20, 1
      %p80 = por %p78, %p79
      %p81 = scmp.ne.s32.totalorder %s70, %s71
      %p82 = scmp.eq.s32.totalorder %s20, 0
      %p83 = por %p81, %p82
      %p84 = scmp.ne.s32.totalorder %s70, %s71
      %p85 = scmp.eq.s32.totalorder %s21, 1
      %p86 = por %p84, %p85
      %p88 = scmp.ne.s32.totalorder %s71, %s87
      %p89 = scmp.eq.s32.totalorder %s21, 0
      %p90 = por %p88, %p89
      %s92 = sadd.s32 %s91, 1
      %p95 = scmp.eq.s32.totalorder %s15, 1
      %p96 = scmp.ne.s32.totalorder %s91, %s93
      %p97 = scmp.eq.s32.totalorder %s15, 0
      %p98 = por %p96, %p97
      %p99 = scmp.ne.s32.totalorder %s91, %s93
      %p100 = scmp.eq.s32.totalorder %s20, 1
      %p101 = por %p99, %p100
      %p102 = scmp.ne.s32.totalorder %s93, %s94
      %p103 = scmp.eq.s32.totalorder %s20, 0
      %p104 = por %p102, %p103
      %p105 = scmp.ne.s32.totalorder %s93, %s94
      %p106 = scmp.eq.s32.totalorder %s21, 1
      %p107 = por %p105, %p106
      %p109 = scmp.ne.s32.totalorder %s94, %s108
      %p110 = scmp.eq.s32.totalorder %s21, 0
      %p111 = por %p109, %p110
      %s113 = sadd.s32 %s112, 1
      %p116 = scmp.eq.s32.totalorder %s15, 1
      %p117 = scmp.ne.s32.totalorder %s112, %s114
      %p118 = scmp.eq.s32.totalorder %s15, 0
      %p119 = por %p117, %p118
      %p120 = scmp.ne.s32.totalorder %s112, %s114
      %p121 = scmp.eq.s32.totalorder %s20, 1
      %p122 = por %p120, %p121
      %p123 = scmp.ne.s32.totalorder %s114, %s115
      %p124 = scmp.eq.s32.totalorder %s20, 0
      %p125 = por %p123, %p124
      %p126 = scmp.ne.s32.totalorder %s114, %s115
      %p127 = scmp.eq.s32.totalorder %s21, 1
      %p128 = por %p126, %p127
      %p130 = scmp.ne.s32.totalorder %s115, %s129
      %p131 = scmp.eq.s32.totalorder %s21, 0
      %p132 = por %p130, %p131
      %s134 = sadd.s32 %s133, 1
      %p137 = scmp.eq.s32.totalorder %s15, 1
      %p138 = scmp.ne.s32.totalorder %s133, %s135
      %p139 = scmp.eq.s32.totalorder %s15, 0
      %p140 = por %p138, %p139
      %p141 = scmp.ne.s32.totalorder %s133, %s135
      %p142 = scmp.eq.s32.totalorder %s20, 1
      %p143 = por %p141, %p142
      %p144 = scmp.ne.s32.totalorder %s135, %s136
      %p145 = scmp.eq.s32.totalorder %s20, 0
      %p146 = por %p144, %p145
      %p147 = scmp.ne.s32.totalorder %s135, %s136
      %p148 = scmp.eq.s32.totalorder %s21, 1
      %p149 = por %p147, %p148
      %p151 = scmp.ne.s32.totalorder %s136, %s150
      %p152 = scmp.eq.s32.totalorder %s21, 0
      %p153 = por %p151, %p152
      %s155 = sadd.s32 %s154, 1
      %p158 = scmp.eq.s32.totalorder %s15, 1
      %p159 = scmp.ne.s32.totalorder %s154, %s156
      %p160 = scmp.eq.s32.totalorder %s15, 0
      %p161 = por %p159, %p160
      %p162 = scmp.ne.s32.totalorder %s154, %s156
      %p163 = scmp.eq.s32.totalorder %s20, 1
      %p164 = por %p162, %p163
      %p165 = scmp.ne.s32.totalorder %s156, %s157
      %p166 = scmp.eq.s32.totalorder %s20, 0
      %p167 = por %p165, %p166
      %p168 = scmp.ne.s32.totalorder %s156, %s157
      %p169 = scmp.eq.s32.totalorder %s21, 1
      %p170 = por %p168, %p169
      %p172 = scmp.ne.s32.totalorder %s157, %s171
      %p173 = scmp.eq.s32.totalorder %s21, 0
      %p174 = por %p172, %p173
      %s175 = ssub.s32 %s22, %s34
      %s176 = ssub.s32 %s23, %s30
      %s177 = sor.u32 %s175, %s176
      %p178 = scmp.eq.s32.totalorder %s177, 0
      %s180 = sadd.s32 %s179, 1
      %s181 = scalar_select %p178, %s179, %s180
      %p184 = pneg %p178
      %p185 = scmp.eq.s32.totalorder %s15, 1
      %p186 = por %p184, %p185
      %p187 = scmp.ne.s32.totalorder %s179, %s182
      %p188 = scmp.eq.s32.totalorder %s15, 0
      %p189 = por %p187, %p188
      %p190 = scmp.ne.s32.totalorder %s179, %s182
      %p191 = scmp.eq.s32.totalorder %s20, 1
      %p192 = por %p190, %p191
      %p193 = scmp.ne.s32.totalorder %s182, %s183
      %p194 = scmp.eq.s32.totalorder %s20, 0
      %p195 = por %p193, %p194
      %p196 = scmp.ne.s32.totalorder %s182, %s183
      %p197 = scmp.eq.s32.totalorder %s21, 1
      %p198 = por %p196, %p197
      %p200 = scmp.ne.s32.totalorder %s183, %s199
      %p201 = scmp.eq.s32.totalorder %s21, 0
      %p202 = por %p200, %p201
      %p203 = scmp.le.s32.totalorder 1, %s15
      %p204 = scmp.lt.s32.totalorder %s15, 3
      %p205 = pnand %p203, %p204
      %p206 = pneg %p205
      // Predicated region
      $region9: #{tpu_custom_call.1} parent=5 // pred_check
        _
      $region10: #{tpu_custom_call.1} parent=5 // pred_check_branch
        %208 = sbr.rel (%p205) target = $region12
      $region11: #{tpu_custom_call.1} parent=5 // pred_region
        %s209 = ssub.s32 %s15, 1
        // Predicated region
        $region13: #{tpu_custom_call.1} parent=11 // pred_check
          %p210 = pneg %p104
        $region14: #{tpu_custom_call.1} parent=11 // pred_check_branch
          %212 = sbr.rel (%p210) target = $region16
        $region15: #{tpu_custom_call.1} parent=11 // pred_region
          _
        $region16: #{tpu_custom_call.1} parent=11 // pred_fallthru
          _
        // Predicated region
        $region17: #{tpu_custom_call.1} parent=11 // pred_check
          %p213 = pneg %p125
        $region18: #{tpu_custom_call.1} parent=11 // pred_check_branch
          %215 = sbr.rel (%p213) target = $region20
        $region19: #{tpu_custom_call.1} parent=11 // pred_region
          _
        $region20: #{tpu_custom_call.1} parent=11 // pred_fallthru
          _
        // Predicated region
        $region21: #{tpu_custom_call.1} parent=11 // pred_check
          %p216 = pneg %p146
        $region22: #{tpu_custom_call.1} parent=11 // pred_check_branch
          %218 = sbr.rel (%p216) target = $region24
        $region23: #{tpu_custom_call.1} parent=11 // pred_region
          _
        $region24: #{tpu_custom_call.1} parent=11 // pred_fallthru
          _
        // Predicated region
        $region25: #{tpu_custom_call.1} parent=11 // pred_check
          %p219 = pneg %p167
        $region26: #{tpu_custom_call.1} parent=11 // pred_check_branch
          %221 = sbr.rel (%p219) target = $region28
        $region27: #{tpu_custom_call.1} parent=11 // pred_region
          _
        $region28: #{tpu_custom_call.1} parent=11 // pred_fallthru
          _
      $region12: #{tpu_custom_call.1} parent=5 // pred_fallthru
        _
      %p222 = scmp.lt.s32.totalorder %s15, 2
      // Predicated region
      $region29: #{tpu_custom_call.1} parent=5 // pred_check
        %p223 = pneg %p222
      $region30: #{tpu_custom_call.1} parent=5 // pred_check_branch
        %225 = sbr.rel (%p223) target = $region32
      $region31: #{tpu_custom_call.1} parent=5 // pred_region
        // Predicated region
        $region33: #{tpu_custom_call.1} parent=31 // pred_check
          %p226 = pneg %p49
        $region34: #{tpu_custom_call.1} parent=31 // pred_check_branch
          %228 = sbr.rel (%p226) target = $region36
        $region35: #{tpu_custom_call.1} parent=31 // pred_region
          %s229 = smul.u32 2, %s23
          %p230 = scmp.lt.s32.totalorder %s22, 1
          %s231 = scalar_select %p230, %s22, 1
          %p232 = scmp.lt.s32.totalorder %s229, 1
          %s233 = scalar_select %p232, %s229, 1
          %s234 = smul.addr %s231, 16
          %s235 = sadd.s32 %s233, %s234
          %s236 = smul.addr %s235, 8
          %s237 = scalar_lea.vmem %s0, %s236
          %s238 = smul.u32 2, %s23
        $region36: #{tpu_custom_call.1} parent=31 // pred_fallthru
          _
        // Predicated region
        $region37: #{tpu_custom_call.1} parent=31 // pred_check
          %p239 = pneg %p77
        $region38: #{tpu_custom_call.1} parent=31 // pred_check_branch
          %241 = sbr.rel (%p239) target = $region40
        $region39: #{tpu_custom_call.1} parent=31 // pred_region
          %s242 = smul.u32 2, %s23
          %p243 = scmp.lt.s32.totalorder %s22, 1
          %s244 = scalar_select %p243, %s22, 1
          %p245 = scmp.lt.s32.totalorder %s242, 1
          %s246 = scalar_select %p245, %s242, 1
          %s247 = smul.addr %s244, 8
          %s248 = sadd.s32 %s246, %s247
          %s249 = smul.addr %s248, 8
          %s250 = scalar_lea.vmem %s1, %s249
          %s251 = smul.u32 2, %s23
        $region40: #{tpu_custom_call.1} parent=31 // pred_fallthru
          _
      $region32: #{tpu_custom_call.1} parent=5 // pred_fallthru
        _
      %p252 = scmp.le.s32.totalorder 1, %s15
      %p253 = scmp.lt.s32.totalorder %s15, 3
      %p254 = pnand %p252, %p253
      %p255 = pneg %p254
      // Predicated region
      $region41: #{tpu_custom_call.1} parent=5 // pred_check
        _
      $region42: #{tpu_custom_call.1} parent=5 // pred_check_branch
        %257 = sbr.rel (%p254) target = $region44
      $region43: #{tpu_custom_call.1} parent=5 // pred_region
        %s258 = ssub.s32 %s15, 1
        %s259 = smul.u32 2, %s25
        %p260 = scmp.lt.s32.totalorder %s24, 1
        %s261 = scalar_select %p260, %s24, 1
        %p262 = scmp.lt.s32.totalorder %s259, 1
        %s263 = scalar_select %p262, %s259, 1
        %s264 = smul.addr %s261, 16
        %s265 = sadd.s32 %s263, %s264
        %s266 = smul.addr %s265, 8
        %s267 = scalar_lea.vmem %s0, %s266
        %p268 = pneg %p55
        %p269 = pneg %p52
        %s270 = smul.u32 2, %s25
        %p271 = scmp.lt.s32.totalorder %s24, 1
        %s272 = scalar_select %p271, %s24, 1
        %p273 = scmp.lt.s32.totalorder %s270, 1
        %s274 = scalar_select %p273, %s270, 1
        %s275 = smul.addr %s272, 8
        %s276 = sadd.s32 %s274, %s275
        %s277 = smul.addr %s276, 8
        %s278 = scalar_lea.vmem %s1, %s277
        %p279 = pneg %p83
        %p280 = pneg %p80
        %p281 = pneg %p104
        %p282 = pneg %p101
        %p283 = pneg %p125
        %p284 = pneg %p122
        %p285 = pneg %p146
        %p286 = pneg %p143
        %p287 = pneg %p167
        %p288 = pneg %p164
        %p289 = pneg %p195
        %p290 = pneg %p192
        %s291 = sand.u32 %s182, 1
        %s292 = scalar_lea.sflag [#allocation3], %s291
        %s293 = sand.u32 %s182, 1
        %s294 = smul.addr %s293, 128
        %s295 = scalar_lea.vmem [#allocation2], %s294
        %s296 = smul.u32 2, %s25
        %p297 = scmp.lt.s32.totalorder %s24, 1
        %s298 = scalar_select %p297, %s24, 1
        %p299 = scmp.lt.s32.totalorder %s296, 1
        %s300 = scalar_select %p299, %s296, 1
        %s301 = smul.addr %s298, 16
        %s302 = sadd.s32 %s300, %s301
        %s303 = smul.addr %s302, 8
        %s304 = scalar_lea.vmem %s0, %s303
        %s305 = smul.u32 2, %s25
        %s306 = smul.u32 2, %s25
        %p307 = scmp.lt.s32.totalorder %s24, 1
        %s308 = scalar_select %p307, %s24, 1
        %p309 = scmp.lt.s32.totalorder %s306, 1
        %s310 = scalar_select %p309, %s306, 1
        %s311 = smul.addr %s308, 8
        %s312 = sadd.s32 %s310, %s311
        %s313 = smul.addr %s312, 8
        %s314 = scalar_lea.vmem %s1, %s313
        %s315 = smul.u32 2, %s25
        %s316 = smul.u32 2, %s25
        %v317 = vld [vmem:[%s314] sm:$0xff]
        %v318 = vld [vmem:[%s314 + $0x8] sm:$0xff]
        %v319 = vld [vmem:[%s314 + $0x10] sm:$0xff]
        %v320 = vld [vmem:[%s314 + $0x18] sm:$0xff]
        %v321 = vld [vmem:[%s314 + $0x20] sm:$0xff]
        %v322 = vld [vmem:[%s314 + $0x28] sm:$0xff]
        %v323 = vld [vmem:[%s314 + $0x30] sm:$0xff]
        %v324 = vld [vmem:[%s314 + $0x38] sm:$0xff]
        %v325 = vld [vmem:[%s2] sm:$0xff]
        %v326 = vld [vmem:[%s2 + $0x8] sm:$0xff]
        %v327 = vld [vmem:[%s2 + $0x10] sm:$0xff]
        %v328 = vld [vmem:[%s2 + $0x18] sm:$0xff]
        %v329 = vld [vmem:[%s2 + $0x20] sm:$0xff]
        %v330 = vld [vmem:[%s2 + $0x28] sm:$0xff]
        %v331 = vld [vmem:[%s2 + $0x30] sm:$0xff]
        %v332 = vld [vmem:[%s2 + $0x38] sm:$0xff]
        %v333 = vld [vmem:[%s3] sm:$0xff]
        %v334 = vld [vmem:[%s3 + $0x8] sm:$0xff]
        %v335 = vld [vmem:[%s3 + $0x10] sm:$0xff]
        %v336 = vld [vmem:[%s3 + $0x18] sm:$0xff]
        %v337 = vld [vmem:[%s3 + $0x20] sm:$0xff]
        %v338 = vld [vmem:[%s3 + $0x28] sm:$0xff]
        %v339 = vld [vmem:[%s3 + $0x30] sm:$0xff]
        %v340 = vld [vmem:[%s3 + $0x38] sm:$0xff]
        %342 = vset.pattern.permute.xlu0 0
        %343 = vperm.xlu0 %342, %v333
        %v344 = vpop.permute.xlu0 %343
        %347 = vset.pattern.permute.xlu0 0
        %348 = vperm.xlu0 %347, %v334
        %v349 = vpop.permute.xlu0 %348
        %352 = vset.pattern.permute.xlu0 0
        %353 = vperm.xlu0 %352, %v335
        %v354 = vpop.permute.xlu0 %353
        %357 = vset.pattern.permute.xlu0 0
        %358 = vperm.xlu0 %357, %v336
        %v359 = vpop.permute.xlu0 %358
        %362 = vset.pattern.permute.xlu0 0
        %363 = vperm.xlu0 %362, %v337
        %v364 = vpop.permute.xlu0 %363
        %367 = vset.pattern.permute.xlu0 0
        %368 = vperm.xlu0 %367, %v338
        %v369 = vpop.permute.xlu0 %368
        %372 = vset.pattern.permute.xlu0 0
        %373 = vperm.xlu0 %372, %v339
        %v374 = vpop.permute.xlu0 %373
        %377 = vset.pattern.permute.xlu0 0
        %378 = vperm.xlu0 %377, %v340
        %v379 = vpop.permute.xlu0 %378
        %vm381 = vcmask 261120
        %v383 = vsel %vm381, %v325, 0
        %v386 = vsel %vm381, %v326, 0
        %v389 = vsel %vm381, %v327, 0
        %v392 = vsel %vm381, %v328, 0
        %v395 = vsel %vm381, %v329, 0
        %v398 = vsel %vm381, %v330, 0
        %v401 = vsel %vm381, %v331, 0
        %v404 = vsel %vm381, %v332, 0
        %406 = vmatpush.msra.mxu0 0.0
        %407 = vmatpush.msra.mxu0 0.0
        %408 = vmatpush.msra.mxu0 0.0
        %409 = vmatpush.msra.mxu0 0.0
        %410 = vmatpush.msra.mxu0 0.0
        %411 = vmatpush.msra.mxu0 0.0
        %412 = vmatpush.msra.mxu0 0.0
        %413 = vmatpush.msra.mxu0 0.0
        %414 = vmatpush.msra.mxu0 0.0
        %415 = vmatpush.msra.mxu0 0.0
        %416 = vmatpush.msra.mxu0 0.0
        %417 = vmatpush.msra.mxu0 0.0
        %418 = vmatpush.msra.mxu0 %v323
        %419 = vmatpush.msra.mxu0 %v321
        %420 = vmatpush.msra.mxu0 %v319
        %421 = vmatpush.msra.mxu0 %v317
        %422 = vmatmul.f32.gmra.mxu0 %v383
        %v423 = vpop.f32.mrf.mxu0
        %v424 = vadd.f32 %v344, %v423
        %425 = vmatmul.f32.gmra.mxu0 %v386
        %v426 = vpop.f32.mrf.mxu0
        %v427 = vadd.f32 %v349, %v426
        %428 = vmatmul.f32.gmra.mxu0 %v389
        %v429 = vpop.f32.mrf.mxu0
        %v430 = vadd.f32 %v354, %v429
        %431 = vmatmul.f32.gmra.mxu0 %v392
        %v432 = vpop.f32.mrf.mxu0
        %v433 = vadd.f32 %v359, %v432
        %434 = vmatmul.f32.gmra.mxu0 %v395
        %v435 = vpop.f32.mrf.mxu0
        %v436 = vadd.f32 %v364, %v435
        %437 = vmatmul.f32.gmra.mxu0 %v398
        %v438 = vpop.f32.mrf.mxu0
        %v439 = vadd.f32 %v369, %v438
        %440 = vmatmul.f32.gmra.mxu0 %v401
        %v441 = vpop.f32.mrf.mxu0
        %v442 = vadd.f32 %v374, %v441
        %443 = vmatmul.f32.gmra.mxu0 %v404
        %v444 = vpop.f32.mrf.mxu0
        %v445 = vadd.f32 %v379, %v444
        %446 = vdwg.mxu0
        %447 = vmatpush.msra.mxu0 0.0
        %448 = vmatpush.msra.mxu0 0.0
        %449 = vmatpush.msra.mxu0 0.0
        %450 = vmatpush.msra.mxu0 0.0
        %451 = vmatpush.msra.mxu0 0.0
        %452 = vmatpush.msra.mxu0 0.0
        %453 = vmatpush.msra.mxu0 0.0
        %454 = vmatpush.msra.mxu0 0.0
        %455 = vmatpush.msra.mxu0 0.0
        %456 = vmatpush.msra.mxu0 0.0
        %457 = vmatpush.msra.mxu0 0.0
        %458 = vmatpush.msra.mxu0 0.0
        %459 = vmatpush.msra.mxu0 %v324
        %460 = vmatpush.msra.mxu0 %v322
        %461 = vmatpush.msra.mxu0 %v320
        %462 = vmatpush.msra.mxu0 %v318
        %463 = vmatmul.f32.gmra.mxu0 %v383
        %v464 = vpop.f32.mrf.mxu0
        %v465 = vadd.f32 %v344, %v464
        %466 = vmatmul.f32.gmra.mxu0 %v386
        %v467 = vpop.f32.mrf.mxu0
        %v468 = vadd.f32 %v349, %v467
        %469 = vmatmul.f32.gmra.mxu0 %v389
        %v470 = vpop.f32.mrf.mxu0
        %v471 = vadd.f32 %v354, %v470
        %472 = vmatmul.f32.gmra.mxu0 %v392
        %v473 = vpop.f32.mrf.mxu0
        %v474 = vadd.f32 %v359, %v473
        %475 = vmatmul.f32.gmra.mxu0 %v395
        %v476 = vpop.f32.mrf.mxu0
        %v477 = vadd.f32 %v364, %v476
        %478 = vmatmul.f32.gmra.mxu0 %v398
        %v479 = vpop.f32.mrf.mxu0
        %v480 = vadd.f32 %v369, %v479
        %481 = vmatmul.f32.gmra.mxu0 %v401
        %v482 = vpop.f32.mrf.mxu0
        %v483 = vadd.f32 %v374, %v482
        %484 = vmatmul.f32.gmra.mxu0 %v404
        %v485 = vpop.f32.mrf.mxu0
        %v486 = vadd.f32 %v379, %v485
        %487 = vdwg.mxu0
        %v488 = vmul.f32 %v424, 0.2
        %v489 = vmul.f32 %v465, 0.2
        %v490 = vmul.f32 %v427, 0.2
        %v491 = vmul.f32 %v468, 0.2
        %v492 = vmul.f32 %v430, 0.2
        %v493 = vmul.f32 %v471, 0.2
        %v494 = vmul.f32 %v433, 0.2
        %v495 = vmul.f32 %v474, 0.2
        %v496 = vmul.f32 %v436, 0.2
        %v497 = vmul.f32 %v477, 0.2
        %v498 = vmul.f32 %v439, 0.2
        %v499 = vmul.f32 %v480, 0.2
        %v500 = vmul.f32 %v442, 0.2
        %v501 = vmul.f32 %v483, 0.2
        %v502 = vmul.f32 %v445, 0.2
        %v503 = vmul.f32 %v486, 0.2
        %v504 = vmax.f32 %v424, %v488
        %v505 = vmax.f32 %v465, %v489
        %v506 = vmax.f32 %v427, %v490
        %v507 = vmax.f32 %v468, %v491
        %v508 = vmax.f32 %v430, %v492
        %v509 = vmax.f32 %v471, %v493
        %v510 = vmax.f32 %v433, %v494
        %v511 = vmax.f32 %v474, %v495
        %v512 = vmax.f32 %v436, %v496
        %v513 = vmax.f32 %v477, %v497
        %v514 = vmax.f32 %v439, %v498
        %v515 = vmax.f32 %v480, %v499
        %v516 = vmax.f32 %v442, %v500
        %v517 = vmax.f32 %v483, %v501
        %v518 = vmax.f32 %v445, %v502
        %v519 = vmax.f32 %v486, %v503
        %v520 = vld [vmem:[%s4] sm:$0xff]
        %v521 = vld [vmem:[%s4 + $0x8] sm:$0xff]
        %v522 = vld [vmem:[%s4 + $0x10] sm:$0xff]
        %v523 = vld [vmem:[%s4 + $0x18] sm:$0xff]
        %v524 = vld [vmem:[%s4 + $0x20] sm:$0xff]
        %v525 = vld [vmem:[%s4 + $0x28] sm:$0xff]
        %v526 = vld [vmem:[%s4 + $0x30] sm:$0xff]
        %v527 = vld [vmem:[%s4 + $0x38] sm:$0xff]
        %v528 = vld [vmem:[%s4 + $0x40] sm:$0xff]
        %v529 = vld [vmem:[%s4 + $0x48] sm:$0xff]
        %v530 = vld [vmem:[%s4 + $0x50] sm:$0xff]
        %v531 = vld [vmem:[%s4 + $0x58] sm:$0xff]
        %v532 = vld [vmem:[%s4 + $0x60] sm:$0xff]
        %v533 = vld [vmem:[%s4 + $0x68] sm:$0xff]
        %v534 = vld [vmem:[%s4 + $0x70] sm:$0xff]
        %v535 = vld [vmem:[%s4 + $0x78] sm:$0xff]
        %v536 = vld [vmem:[%s5] sm:$0xff]
        %v537 = vld [vmem:[%s5 + $0x8] sm:$0xff]
        %v538 = vld [vmem:[%s5 + $0x10] sm:$0xff]
        %v539 = vld [vmem:[%s5 + $0x18] sm:$0xff]
        %v540 = vld [vmem:[%s5 + $0x20] sm:$0xff]
        %v541 = vld [vmem:[%s5 + $0x28] sm:$0xff]
        %v542 = vld [vmem:[%s5 + $0x30] sm:$0xff]
        %v543 = vld [vmem:[%s5 + $0x38] sm:$0xff]
        %v544 = vld [vmem:[%s5 + $0x40] sm:$0xff]
        %v545 = vld [vmem:[%s5 + $0x48] sm:$0xff]
        %v546 = vld [vmem:[%s5 + $0x50] sm:$0xff]
        %v547 = vld [vmem:[%s5 + $0x58] sm:$0xff]
        %v548 = vld [vmem:[%s5 + $0x60] sm:$0xff]
        %v549 = vld [vmem:[%s5 + $0x68] sm:$0xff]
        %v550 = vld [vmem:[%s5 + $0x70] sm:$0xff]
        %v551 = vld [vmem:[%s5 + $0x78] sm:$0xff]
        %553 = vset.pattern.permute.xlu0 0
        %554 = vperm.xlu0 %553, %v536
        %v555 = vpop.permute.xlu0 %554
        %558 = vset.pattern.permute.xlu0 0
        %559 = vperm.xlu0 %558, %v537
        %v560 = vpop.permute.xlu0 %559
        %563 = vset.pattern.permute.xlu0 0
        %564 = vperm.xlu0 %563, %v538
        %v565 = vpop.permute.xlu0 %564
        %568 = vset.pattern.permute.xlu0 0
        %569 = vperm.xlu0 %568, %v539
        %v570 = vpop.permute.xlu0 %569
        %573 = vset.pattern.permute.xlu0 0
        %574 = vperm.xlu0 %573, %v540
        %v575 = vpop.permute.xlu0 %574
        %578 = vset.pattern.permute.xlu0 0
        %579 = vperm.xlu0 %578, %v541
        %v580 = vpop.permute.xlu0 %579
        %583 = vset.pattern.permute.xlu0 0
        %584 = vperm.xlu0 %583, %v542
        %v585 = vpop.permute.xlu0 %584
        %588 = vset.pattern.permute.xlu0 0
        %589 = vperm.xlu0 %588, %v543
        %v590 = vpop.permute.xlu0 %589
        %593 = vset.pattern.permute.xlu0 0
        %594 = vperm.xlu0 %593, %v544
        %v595 = vpop.permute.xlu0 %594
        %598 = vset.pattern.permute.xlu0 0
        %599 = vperm.xlu0 %598, %v545
        %v600 = vpop.permute.xlu0 %599
        %603 = vset.pattern.permute.xlu0 0
        %604 = vperm.xlu0 %603, %v546
        %v605 = vpop.permute.xlu0 %604
        %608 = vset.pattern.permute.xlu0 0
        %609 = vperm.xlu0 %608, %v547
        %v610 = vpop.permute.xlu0 %609
        %613 = vset.pattern.permute.xlu0 0
        %614 = vperm.xlu0 %613, %v548
        %v615 = vpop.permute.xlu0 %614
        %618 = vset.pattern.permute.xlu0 0
        %619 = vperm.xlu0 %618, %v549
        %v620 = vpop.permute.xlu0 %619
        %623 = vset.pattern.permute.xlu0 0
        %624 = vperm.xlu0 %623, %v550
        %v625 = vpop.permute.xlu0 %624
        %628 = vset.pattern.permute.xlu0 0
        %629 = vperm.xlu0 %628, %v551
        %v630 = vpop.permute.xlu0 %629
        %vm632 = vcmask 523264
        %v634 = vsel %vm632, %v520, 0
        %v637 = vsel %vm632, %v521, 0
        %v640 = vsel %vm632, %v522, 0
        %v643 = vsel %vm632, %v523, 0
        %v646 = vsel %vm632, %v524, 0
        %v649 = vsel %vm632, %v525, 0
        %v652 = vsel %vm632, %v526, 0
        %v655 = vsel %vm632, %v527, 0
        %v658 = vsel %vm632, %v528, 0
        %v661 = vsel %vm632, %v529, 0
        %v664 = vsel %vm632, %v530, 0
        %v667 = vsel %vm632, %v531, 0
        %v670 = vsel %vm632, %v532, 0
        %v673 = vsel %vm632, %v533, 0
        %v676 = vsel %vm632, %v534, 0
        %v679 = vsel %vm632, %v535, 0
        %681 = vmatpush.msra.mxu0 0.0
        %682 = vmatpush.msra.mxu0 0.0
        %683 = vmatpush.msra.mxu0 0.0
        %684 = vmatpush.msra.mxu0 0.0
        %685 = vmatpush.msra.mxu0 0.0
        %686 = vmatpush.msra.mxu0 0.0
        %687 = vmatpush.msra.mxu0 0.0
        %688 = vmatpush.msra.mxu0 0.0
        %689 = vmatpush.msra.mxu0 %v518
        %690 = vmatpush.msra.mxu0 %v516
        %691 = vmatpush.msra.mxu0 %v514
        %692 = vmatpush.msra.mxu0 %v512
        %693 = vmatpush.msra.mxu0 %v510
        %694 = vmatpush.msra.mxu0 %v508
        %695 = vmatpush.msra.mxu0 %v506
        %696 = vmatpush.msra.mxu0 %v504
        %697 = vmatmul.f32.gmra.mxu0 %v634
        %v698 = vpop.f32.mrf.mxu0
        %v699 = vadd.f32 %v555, %v698
        %700 = vmatmul.f32.gmra.mxu0 %v637
        %v701 = vpop.f32.mrf.mxu0
        %v702 = vadd.f32 %v560, %v701
        %703 = vmatmul.f32.gmra.mxu0 %v640
        %v704 = vpop.f32.mrf.mxu0
        %v705 = vadd.f32 %v565, %v704
        %706 = vmatmul.f32.gmra.mxu0 %v643
        %v707 = vpop.f32.mrf.mxu0
        %v708 = vadd.f32 %v570, %v707
        %709 = vmatmul.f32.gmra.mxu0 %v646
        %v710 = vpop.f32.mrf.mxu0
        %v711 = vadd.f32 %v575, %v710
        %712 = vmatmul.f32.gmra.mxu0 %v649
        %v713 = vpop.f32.mrf.mxu0
        %v714 = vadd.f32 %v580, %v713
        %715 = vmatmul.f32.gmra.mxu0 %v652
        %v716 = vpop.f32.mrf.mxu0
        %v717 = vadd.f32 %v585, %v716
        %718 = vmatmul.f32.gmra.mxu0 %v655
        %v719 = vpop.f32.mrf.mxu0
        %v720 = vadd.f32 %v590, %v719
        %721 = vmatmul.f32.gmra.mxu0 %v658
        %v722 = vpop.f32.mrf.mxu0
        %v723 = vadd.f32 %v595, %v722
        %724 = vmatmul.f32.gmra.mxu0 %v661
        %v725 = vpop.f32.mrf.mxu0
        %v726 = vadd.f32 %v600, %v725
        %727 = vmatmul.f32.gmra.mxu0 %v664
        %v728 = vpop.f32.mrf.mxu0
        %v729 = vadd.f32 %v605, %v728
        %730 = vmatmul.f32.gmra.mxu0 %v667
        %v731 = vpop.f32.mrf.mxu0
        %v732 = vadd.f32 %v610, %v731
        %733 = vmatmul.f32.gmra.mxu0 %v670
        %v734 = vpop.f32.mrf.mxu0
        %v735 = vadd.f32 %v615, %v734
        %736 = vmatmul.f32.gmra.mxu0 %v673
        %v737 = vpop.f32.mrf.mxu0
        %v738 = vadd.f32 %v620, %v737
        %739 = vmatmul.f32.gmra.mxu0 %v676
        %v740 = vpop.f32.mrf.mxu0
        %v741 = vadd.f32 %v625, %v740
        %742 = vmatmul.f32.gmra.mxu0 %v679
        %v743 = vpop.f32.mrf.mxu0
        %v744 = vadd.f32 %v630, %v743
        %745 = vdwg.mxu0
        %746 = vmatpush.msra.mxu0 0.0
        %747 = vmatpush.msra.mxu0 0.0
        %748 = vmatpush.msra.mxu0 0.0
        %749 = vmatpush.msra.mxu0 0.0
        %750 = vmatpush.msra.mxu0 0.0
        %751 = vmatpush.msra.mxu0 0.0
        %752 = vmatpush.msra.mxu0 0.0
        %753 = vmatpush.msra.mxu0 0.0
        %754 = vmatpush.msra.mxu0 %v519
        %755 = vmatpush.msra.mxu0 %v517
        %756 = vmatpush.msra.mxu0 %v515
        %757 = vmatpush.msra.mxu0 %v513
        %758 = vmatpush.msra.mxu0 %v511
        %759 = vmatpush.msra.mxu0 %v509
        %760 = vmatpush.msra.mxu0 %v507
        %761 = vmatpush.msra.mxu0 %v505
        %762 = vmatmul.f32.gmra.mxu0 %v634
        %v763 = vpop.f32.mrf.mxu0
        %v764 = vadd.f32 %v555, %v763
        %765 = vmatmul.f32.gmra.mxu0 %v637
        %v766 = vpop.f32.mrf.mxu0
        %v767 = vadd.f32 %v560, %v766
        %768 = vmatmul.f32.gmra.mxu0 %v640
        %v769 = vpop.f32.mrf.mxu0
        %v770 = vadd.f32 %v565, %v769
        %771 = vmatmul.f32.gmra.mxu0 %v643
        %v772 = vpop.f32.mrf.mxu0
        %v773 = vadd.f32 %v570, %v772
        %774 = vmatmul.f32.gmra.mxu0 %v646
        %v775 = vpop.f32.mrf.mxu0
        %v776 = vadd.f32 %v575, %v775
        %777 = vmatmul.f32.gmra.mxu0 %v649
        %v778 = vpop.f32.mrf.mxu0
        %v779 = vadd.f32 %v580, %v778
        %780 = vmatmul.f32.gmra.mxu0 %v652
        %v781 = vpop.f32.mrf.mxu0
        %v782 = vadd.f32 %v585, %v781
        %783 = vmatmul.f32.gmra.mxu0 %v655
        %v784 = vpop.f32.mrf.mxu0
        %v785 = vadd.f32 %v590, %v784
        %786 = vmatmul.f32.gmra.mxu0 %v658
        %v787 = vpop.f32.mrf.mxu0
        %v788 = vadd.f32 %v595, %v787
        %789 = vmatmul.f32.gmra.mxu0 %v661
        %v790 = vpop.f32.mrf.mxu0
        %v791 = vadd.f32 %v600, %v790
        %792 = vmatmul.f32.gmra.mxu0 %v664
        %v793 = vpop.f32.mrf.mxu0
        %v794 = vadd.f32 %v605, %v793
        %795 = vmatmul.f32.gmra.mxu0 %v667
        %v796 = vpop.f32.mrf.mxu0
        %v797 = vadd.f32 %v610, %v796
        %798 = vmatmul.f32.gmra.mxu0 %v670
        %v799 = vpop.f32.mrf.mxu0
        %v800 = vadd.f32 %v615, %v799
        %801 = vmatmul.f32.gmra.mxu0 %v673
        %v802 = vpop.f32.mrf.mxu0
        %v803 = vadd.f32 %v620, %v802
        %804 = vmatmul.f32.gmra.mxu0 %v676
        %v805 = vpop.f32.mrf.mxu0
        %v806 = vadd.f32 %v625, %v805
        %807 = vmatmul.f32.gmra.mxu0 %v679
        %v808 = vpop.f32.mrf.mxu0
        %v809 = vadd.f32 %v630, %v808
        %810 = vdwg.mxu0
        %v811 = vld [vmem:[%s304] sm:$0xff]
        %v812 = vld [vmem:[%s304 + $0x8] sm:$0xff]
        %v813 = vld [vmem:[%s304 + $0x10] sm:$0xff]
        %v814 = vld [vmem:[%s304 + $0x18] sm:$0xff]
        %v815 = vld [vmem:[%s304 + $0x20] sm:$0xff]
        %v816 = vld [vmem:[%s304 + $0x28] sm:$0xff]
        %v817 = vld [vmem:[%s304 + $0x30] sm:$0xff]
        %v818 = vld [vmem:[%s304 + $0x38] sm:$0xff]
        %v819 = vld [vmem:[%s304 + $0x40] sm:$0xff]
        %v820 = vld [vmem:[%s304 + $0x48] sm:$0xff]
        %v821 = vld [vmem:[%s304 + $0x50] sm:$0xff]
        %v822 = vld [vmem:[%s304 + $0x58] sm:$0xff]
        %v823 = vld [vmem:[%s304 + $0x60] sm:$0xff]
        %v824 = vld [vmem:[%s304 + $0x68] sm:$0xff]
        %v825 = vld [vmem:[%s304 + $0x70] sm:$0xff]
        %v826 = vld [vmem:[%s304 + $0x78] sm:$0xff]
        %v827 = vmul.f32 %v811, %v699
        %v828 = vmul.f32 %v812, %v764
        %v829 = vmul.f32 %v813, %v702
        %v830 = vmul.f32 %v814, %v767
        %v831 = vmul.f32 %v815, %v705
        %v832 = vmul.f32 %v816, %v770
        %v833 = vmul.f32 %v817, %v708
        %v834 = vmul.f32 %v818, %v773
        %v835 = vmul.f32 %v819, %v711
        %v836 = vmul.f32 %v820, %v776
        %v837 = vmul.f32 %v821, %v714
        %v838 = vmul.f32 %v822, %v779
        %v839 = vmul.f32 %v823, %v717
        %v840 = vmul.f32 %v824, %v782
        %v841 = vmul.f32 %v825, %v720
        %v842 = vmul.f32 %v826, %v785
        %v843 = vadd.f32 %v827, %v723
        %v844 = vadd.f32 %v828, %v788
        %v845 = vadd.f32 %v829, %v726
        %v846 = vadd.f32 %v830, %v791
        %v847 = vadd.f32 %v831, %v729
        %v848 = vadd.f32 %v832, %v794
        %v849 = vadd.f32 %v833, %v732
        %v850 = vadd.f32 %v834, %v797
        %v851 = vadd.f32 %v835, %v735
        %v852 = vadd.f32 %v836, %v800
        %v853 = vadd.f32 %v837, %v738
        %v854 = vadd.f32 %v838, %v803
        %v855 = vadd.f32 %v839, %v741
        %v856 = vadd.f32 %v840, %v806
        %v857 = vadd.f32 %v841, %v744
        %v858 = vadd.f32 %v842, %v809
        %859 = vst [vmem:[%s295] sm:$0xff] %v843
        %860 = vst [vmem:[%s295 + $0x8] sm:$0xff] %v844
        %861 = vst [vmem:[%s295 + $0x10] sm:$0xff] %v845
        %862 = vst [vmem:[%s295 + $0x18] sm:$0xff] %v846
        %863 = vst [vmem:[%s295 + $0x20] sm:$0xff] %v847
        %864 = vst [vmem:[%s295 + $0x28] sm:$0xff] %v848
        %865 = vst [vmem:[%s295 + $0x30] sm:$0xff] %v849
        %866 = vst [vmem:[%s295 + $0x38] sm:$0xff] %v850
        %867 = vst [vmem:[%s295 + $0x40] sm:$0xff] %v851
        %868 = vst [vmem:[%s295 + $0x48] sm:$0xff] %v852
        %869 = vst [vmem:[%s295 + $0x50] sm:$0xff] %v853
        %870 = vst [vmem:[%s295 + $0x58] sm:$0xff] %v854
        %871 = vst [vmem:[%s295 + $0x60] sm:$0xff] %v855
        %872 = vst [vmem:[%s295 + $0x68] sm:$0xff] %v856
        %873 = vst [vmem:[%s295 + $0x70] sm:$0xff] %v857
        %874 = vst [vmem:[%s295 + $0x78] sm:$0xff] %v858
        %s875 = sand.u32 %s182, 1
        %s876 = scalar_lea.sflag [#allocation3], %s875
        %s877 = sand.u32 %s182, 1
        %s878 = smul.addr %s877, 128
        %s879 = scalar_lea.vmem [#allocation2], %s878
        // Predicated region
        $region45: #{tpu_custom_call.1} parent=43 // pred_check
          %p880 = pneg %p192
        $region46: #{tpu_custom_call.1} parent=43 // pred_check_branch
          %882 = sbr.rel (%p880) target = $region48
        $region47: #{tpu_custom_call.1} parent=43 // pred_region
          %s883 = smul.u32 2, %s25
          %885 = vsyncadd %s876, 0
          %s886 = smul.addr %s24, 16
          %s887 = sadd.s32 %s883, %s886
          %s888 = smul.addr %s887, 8
          %s889 = scalar_lea.hbm %s6, %s888
          %s890 = sshll.u32 %s879, 4
          %s891 = int_to_ptr.vmem [resolvable:$true] %s890
          %s892 = sshll.u32 %s889, 4
          %s893 = int_to_ptr.hbm [resolvable:$true] %s892
          %898 = dma.vmem_to_hbm [thread:$0]  %s891, 2048, %s893, %s876, 256, 256, 16
        $region48: #{tpu_custom_call.1} parent=43 // pred_fallthru
          _
      $region44: #{tpu_custom_call.1} parent=5 // pred_fallthru
        _
      %p899 = scmp.le.s32.totalorder 2, %s15
      // Predicated region
      $region49: #{tpu_custom_call.1} parent=5 // pred_check
        %p900 = pneg %p899
      $region50: #{tpu_custom_call.1} parent=5 // pred_check_branch
        %902 = sbr.rel (%p900) target = $region52
      $region51: #{tpu_custom_call.1} parent=5 // pred_region
        %s903 = ssub.s32 %s15, 2
        // Predicated region
        $region53: #{tpu_custom_call.1} parent=51 // pred_check
          %p904 = pneg %p198
        $region54: #{tpu_custom_call.1} parent=51 // pred_check_branch
          %906 = sbr.rel (%p904) target = $region56
        $region55: #{tpu_custom_call.1} parent=51 // pred_region
          %s907 = sand.u32 %s183, 1
          %s908 = scalar_lea.sflag [#allocation3], %s907
          %s909 = sand.u32 %s183, 1
          %s910 = smul.addr %s909, 128
          %s911 = scalar_lea.vmem [#allocation2], %s910
          %913 = dma.done %s908, 2048
        $region56: #{tpu_custom_call.1} parent=51 // pred_fallthru
          _
      $region52: #{tpu_custom_call.1} parent=5 // pred_fallthru
        _
    $region6: #{tpu_custom_call.1} parent=1 // loop_footer
      %s19 = sadd.s32 1, %s15
    $region7: #{tpu_custom_call.1} parent=1 // loop_footer_branch
      %14 = sbr.rel target = $region3
    $region8: #{tpu_custom_call.1} parent=1 // loop_exit
      _
    %914 = vsyncpa [#allocation3], 1
    %s915 = scalar_lea.sflag [#allocation3], 1
    %916 = vsyncpa %s915, 1

</llo_original>
